<compile_context>
chip_gen: v5e
topology: v5e:2x2
jax: 0.10.0
libtpu: 0.0.40
codegen_flags: <defaults>
</compile_context>

<pallas_src>
import jax
import jax.numpy as jnp
from jax.experimental import pallas as pl
from jax.experimental.pallas import tpu as pltpu

HEAD_LANES = 128  # age(3) | gender(2) | mask(3) packed into one lane-dense slab
K_PAD = 128       # 9*Cin contraction dim, zero-padded to a full lane width


# ----------------------------------------------------------------------------
# Fused kernel: one grid step == B_blk batch elements.
#   patch_ref : (B_blk, H*W, K_PAD)  pre-im2col'd patches, bf16 (zero-padded K)
#   wconv_ref : (K_PAD, Cout)        im2col conv weight, bf16 (zero-padded K)
#   bconv_ref : (1, Cout)            conv bias, f32
#   whead_ref : (Cout, 128)          [age | gender | mask | zeros] head weights, bf16
#   bhead_ref : (1, 128)             packed head bias, f32
#   out_ref   : (B_blk, 1, 128)      packed logits
# ----------------------------------------------------------------------------
def fused_backbone_heads_kernel(patch_ref, wconv_ref, bconv_ref, whead_ref,
                                bhead_ref, out_ref):
    b_blk, hw, k_pad = patch_ref.shape
    cout = wconv_ref.shape[-1]

    # Single MXU matmul over all B_blk*H*W patch rows (bf16 in, f32 acc).
    patch = patch_ref[...].reshape(b_blk * hw, k_pad)            # bf16, lane-dense
    feat = jnp.dot(patch, wconv_ref[...],
                   preferred_element_type=jnp.float32)           # (B*HW, Cout) f32
    feat = jnp.maximum(feat + bconv_ref[...], 0.0)               # conv bias + ReLU

    # Global average pool per image (sum over the H*W rows of each image).
    pooled = feat.reshape(b_blk, hw, cout).sum(axis=1) * (1.0 / float(hw))

    # Classifier heads: one lane-padded bf16 linear, f32 accumulation + f32 bias.
    logits = jnp.dot(pooled.astype(jnp.bfloat16), whead_ref[...],
                     preferred_element_type=jnp.float32) + bhead_ref[...]
    out_ref[...] = logits.reshape(b_blk, 1, HEAD_LANES)


# ----------------------------------------------------------------------------
# Wrapper
# ----------------------------------------------------------------------------
def _pick_batch_block(n, hw, target_m=1024):
    """Largest per-step batch block such that M >= ~target_m while keeping the
    grid >= 2 steps whenever N >= 2 (v7x has 2 TensorCores)."""
    b = max(1, min(n, target_m // max(hw, 1)))
    while b > 1 and (n // b) < 2:
        b -= 1
    while n % b != 0:
        b -= 1
    return b


def my_model_forward(x_nchw, params):
    """x_nchw: (N, Cin, H, W) float32. Returns (age, gender, mask) logits."""
    N, Cin, H, W = x_nchw.shape
    Cout = params["conv_w"].shape[-1]
    HW = H * W
    K = 9 * Cin
    assert K <= K_PAD, "9*Cin must fit the padded contraction width"

    # ---- Wrapper-side im2col (plain XLA ops; fuse into one pass) -------------
    # NCHW -> NHWC, halo pad, gather the 9 taps along the channel axis in
    # (dy, dx, cin) order so it matches conv_w.reshape(9*Cin, Cout).
    x_nhwc = jnp.transpose(x_nchw, (0, 2, 3, 1))
    x_pad = jnp.pad(x_nhwc, ((0, 0), (1, 1), (1, 1), (0, 0)))
    taps = [x_pad[:, dy:dy + H, dx:dx + W, :]
            for dy in range(3) for dx in range(3)]
    patches = jnp.concatenate(taps, axis=-1).reshape(N, HW, K)
    patches = jnp.pad(patches, ((0, 0), (0, 0), (0, K_PAD - K)))
    patches = patches.astype(jnp.bfloat16)                        # (N, HW, 128)

    # ---- Weight prep ---------------------------------------------------------
    w_conv = params["conv_w"].reshape(K, Cout)
    w_conv = jnp.pad(w_conv, ((0, K_PAD - K), (0, 0))).astype(jnp.bfloat16)
    b_conv = params["conv_b"].astype(jnp.float32)                  # (1, Cout)

    # Concatenate the three head weights into one lane-padded (Cout, 128) slab.
    w_head = jnp.zeros((Cout, HEAD_LANES), jnp.float32)
    w_head = w_head.at[:, 0:3].set(params["age_w"])
    w_head = w_head.at[:, 3:5].set(params["gender_w"])
    w_head = w_head.at[:, 5:8].set(params["mask_w"])
    w_head = w_head.astype(jnp.bfloat16)
    b_head = jnp.zeros((1, HEAD_LANES), jnp.float32)
    b_head = b_head.at[:, 0:3].set(params["age_b"])
    b_head = b_head.at[:, 3:5].set(params["gender_b"])
    b_head = b_head.at[:, 5:8].set(params["mask_b"])

    # ---- Grid / blocking -----------------------------------------------------
    B_blk = _pick_batch_block(N, HW)
    grid = (N // B_blk,)

    flops = 2 * N * HW * K_PAD * Cout + 2 * N * Cout * HEAD_LANES
    bytes_accessed = (N * HW * K_PAD * 2            # bf16 patches
                      + K_PAD * Cout * 2            # bf16 conv weights
                      + Cout * 4                    # conv bias
                      + Cout * HEAD_LANES * 2       # bf16 head weights
                      + HEAD_LANES * 4              # head bias
                      + N * HEAD_LANES * 4)         # logits out

    out = pl.pallas_call(
        fused_backbone_heads_kernel,
        grid=grid,
        in_specs=[
            pl.BlockSpec((B_blk, HW, K_PAD), lambda n: (n, 0, 0)),
            pl.BlockSpec((K_PAD, Cout), lambda n: (0, 0)),
            pl.BlockSpec((1, Cout), lambda n: (0, 0)),
            pl.BlockSpec((Cout, HEAD_LANES), lambda n: (0, 0)),
            pl.BlockSpec((1, HEAD_LANES), lambda n: (0, 0)),
        ],
        out_specs=pl.BlockSpec((B_blk, 1, HEAD_LANES), lambda n: (n, 0, 0)),
        out_shape=jax.ShapeDtypeStruct((N, 1, HEAD_LANES), jnp.float32),
        compiler_params=pltpu.CompilerParams(
            dimension_semantics=("parallel",)),
        cost_estimate=pl.CostEstimate(
            flops=flops, transcendentals=0, bytes_accessed=bytes_accessed),
    )(patches, w_conv, b_conv, w_head, b_head)

    logits = out[:, 0, :]                                          # (N, 128)
    age = logits[:, 0:3]
    gender = logits[:, 3:5]
    mask = logits[:, 5:8]
    # Match PyTorch forward return order: (age_label, gender_label, mask_label)
    return age, gender, mask


def init_params(key, cin, n_features):
    ks = jax.random.split(key, 8)
    s_conv = 1.0 / jnp.sqrt(3.0 * 3.0 * cin)
    s_head = 1.0 / jnp.sqrt(float(n_features))
    return {
        "conv_w": jax.random.normal(ks[0], (3, 3, cin, n_features), jnp.float32) * s_conv,
        "conv_b": jax.random.normal(ks[1], (1, n_features), jnp.float32) * s_conv,
        "age_w": jax.random.normal(ks[2], (n_features, 3), jnp.float32) * s_head,
        "age_b": jax.random.normal(ks[3], (1, 3), jnp.float32) * s_head,
        "gender_w": jax.random.normal(ks[4], (n_features, 2), jnp.float32) * s_head,
        "gender_b": jax.random.normal(ks[5], (1, 2), jnp.float32) * s_head,
        "mask_w": jax.random.normal(ks[6], (n_features, 3), jnp.float32) * s_head,
        "mask_b": jax.random.normal(ks[7], (1, 3), jnp.float32) * s_head,
    }


if __name__ == "__main__":
    key = jax.random.PRNGKey(0)
    k_x, k_p = jax.random.split(key)

    N, Cin, H, W = 2, 4, 16, 16      # small synthetic NCHW input
    n_features = 128                  # stand-in for model.num_features (lane-dense)

    x = jax.random.normal(k_x, (N, Cin, H, W), jnp.float32)
    params = init_params(k_p, Cin, n_features)

    fwd = jax.jit(my_model_forward)
    age, gender, mask = fwd(x, params)
    jax.block_until_ready((age, gender, mask))

    assert age.shape == (N, 3) and gender.shape == (N, 2) and mask.shape == (N, 3)
    print("KERNEL_OK")
</pallas_src>

<mosaic_0001>
module attributes {stable_mosaic.version = 11 : i64} {
  func.func @fused_backbone_heads_kernel(%arg0: i32, %arg1: memref<1x256x128xbf16, #tpu.memory_space<vmem>>, %arg2: memref<128x128xbf16, #tpu.memory_space<vmem>>, %arg3: memref<1x128xf32, #tpu.memory_space<vmem>>, %arg4: memref<128x128xbf16, #tpu.memory_space<vmem>>, %arg5: memref<1x128xf32, #tpu.memory_space<vmem>>, %arg6: memref<1x1x128xf32, #tpu.memory_space<vmem>>) attributes {dimension_semantics = [#tpu.dimension_semantics<parallel>], iteration_bounds = array<i64: 2>, scalar_prefetch = 0 : i64, scratch_operands = 0 : i64, tpu.core_type = #tpu.core_type<tc>, window_params = [{transform_indices = @transform_0, window_bounds = array<i64: 1, 256, 128>}, {pipeline_mode = #tpu.pipeline_mode<synchronous>, transform_indices = @transform_1, window_bounds = array<i64: 128, 128>}, {pipeline_mode = #tpu.pipeline_mode<synchronous>, transform_indices = @transform_2, window_bounds = array<i64: 1, 128>}, {pipeline_mode = #tpu.pipeline_mode<synchronous>, transform_indices = @transform_3, window_bounds = array<i64: 128, 128>}, {pipeline_mode = #tpu.pipeline_mode<synchronous>, transform_indices = @transform_4, window_bounds = array<i64: 1, 128>}, {transform_indices = @transform_5, window_bounds = array<i64: 1, 1, 128>}]} {
    %c0 = arith.constant 0 : index
    %c0_0 = arith.constant 0 : index
    %c0_1 = arith.constant 0 : index
    %0 = vector.load %arg1[%c0, %c0_0, %c0_1] : memref<1x256x128xbf16, #tpu.memory_space<vmem>>, vector<1x256x128xbf16>
    %1 = vector.shape_cast %0 : vector<1x256x128xbf16> to vector<256x128xbf16>
    %c0_2 = arith.constant 0 : index
    %c0_3 = arith.constant 0 : index
    %2 = vector.load %arg2[%c0_2, %c0_3] : memref<128x128xbf16, #tpu.memory_space<vmem>>, vector<128x128xbf16>
    %cst = arith.constant dense<0.000000e+00> : vector<256x128xf32>
    %3 = tpu.matmul %1, %2, %cst {dimension_numbers = #tpu.dot_dimension_numbers<[1], [0], [0], [1], [0, 0, 1, 1], [], []>} : vector<256x128xbf16>, vector<128x128xbf16>, vector<256x128xf32> -> vector<256x128xf32>
    %c0_4 = arith.constant 0 : index
    %c0_5 = arith.constant 0 : index
    %4 = vector.load %arg3[%c0_4, %c0_5] : memref<1x128xf32, #tpu.memory_space<vmem>>, vector<1x128xf32>
    %5 = vector.broadcast %4 : vector<1x128xf32> to vector<256x128xf32>
    %6 = arith.addf %3, %5 : vector<256x128xf32>
    %cst_6 = arith.constant 0.000000e+00 : f32
    %7 = vector.broadcast %cst_6 : f32 to vector<256x128xf32>
    %8 = arith.maximumf %6, %7 : vector<256x128xf32>
    %9 = vector.shape_cast %8 : vector<256x128xf32> to vector<1x256x128xf32>
    %cst_7 = arith.constant dense<0.000000e+00> : vector<1x128xf32>
    %10 = vector.multi_reduction <add>, %9, %cst_7 [1] : vector<1x256x128xf32> to vector<1x128xf32>
    %cst_8 = arith.constant 3.906250e-03 : f32
    %11 = vector.broadcast %cst_8 : f32 to vector<1x128xf32>
    %12 = arith.mulf %10, %11 : vector<1x128xf32>
    %13 = arith.truncf %12 : vector<1x128xf32> to vector<1x128xbf16>
    %c0_9 = arith.constant 0 : index
    %c0_10 = arith.constant 0 : index
    %14 = vector.load %arg4[%c0_9, %c0_10] : memref<128x128xbf16, #tpu.memory_space<vmem>>, vector<128x128xbf16>
    %cst_11 = arith.constant dense<0.000000e+00> : vector<1x128xf32>
    %15 = tpu.matmul %13, %14, %cst_11 {dimension_numbers = #tpu.dot_dimension_numbers<[1], [0], [0], [1], [0, 0, 1, 1], [], []>} : vector<1x128xbf16>, vector<128x128xbf16>, vector<1x128xf32> -> vector<1x128xf32>
    %c0_12 = arith.constant 0 : index
    %c0_13 = arith.constant 0 : index
    %16 = vector.load %arg5[%c0_12, %c0_13] : memref<1x128xf32, #tpu.memory_space<vmem>>, vector<1x128xf32>
    %17 = arith.addf %15, %16 : vector<1x128xf32>
    %18 = vector.shape_cast %17 : vector<1x128xf32> to vector<1x1x128xf32>
    %c0_14 = arith.constant 0 : index
    %c0_15 = arith.constant 0 : index
    %c0_16 = arith.constant 0 : index
    %19 = vector.load %arg6[%c0_14, %c0_15, %c0_16] : memref<1x1x128xf32, #tpu.memory_space<vmem>>, vector<1x1x128xf32>
    tpu.vector_store %arg6[%c0_14, %c0_15, %c0_16], %18 {strides = array<i32>} : memref<1x1x128xf32, #tpu.memory_space<vmem>>, vector<1x1x128xf32>,
    return
  }
  func.func @transform_0(%arg0: i32) -> (i32, i32, i32) {
    %c0_i32 = arith.constant 0 : i32
    %c0_i32_0 = arith.constant 0 : i32
    %c0_i32_1 = arith.constant 0 : i32
    return %arg0, %c0_i32, %c0_i32_0 : i32, i32, i32
  }
  func.func @transform_1(%arg0: i32) -> (i32, i32) {
    %c0_i32 = arith.constant 0 : i32
    %c0_i32_0 = arith.constant 0 : i32
    %c0_i32_1 = arith.constant 0 : i32
    return %c0_i32, %c0_i32_0 : i32, i32
  }
  func.func @transform_2(%arg0: i32) -> (i32, i32) {
    %c0_i32 = arith.constant 0 : i32
    %c0_i32_0 = arith.constant 0 : i32
    %c0_i32_1 = arith.constant 0 : i32
    return %c0_i32, %c0_i32_0 : i32, i32
  }
  func.func @transform_3(%arg0: i32) -> (i32, i32) {
    %c0_i32 = arith.constant 0 : i32
    %c0_i32_0 = arith.constant 0 : i32
    %c0_i32_1 = arith.constant 0 : i32
    return %c0_i32, %c0_i32_0 : i32, i32
  }
  func.func @transform_4(%arg0: i32) -> (i32, i32) {
    %c0_i32 = arith.constant 0 : i32
    %c0_i32_0 = arith.constant 0 : i32
    %c0_i32_1 = arith.constant 0 : i32
    return %c0_i32, %c0_i32_0 : i32, i32
  }
  func.func @transform_5(%arg0: i32) -> (i32, i32, i32) {
    %c0_i32 = arith.constant 0 : i32
    %c0_i32_0 = arith.constant 0 : i32
    %c0_i32_1 = arith.constant 0 : i32
    return %arg0, %c0_i32, %c0_i32_0 : i32, i32, i32
  }
}

</mosaic_0001>

<llo_original>
// kernel: my_model_forward.1
$region0: #{my_model_forward.1}
  #allocation0 [shape = 'u32[]', space=smem, size = 0x4, offset = 0x4, fixed_abs, tag = 'smem constant byte address 0x4 - core index']
  #allocation1 [shape = 'u32[72,128]{1,0:T(1,128)}', space=vmem, size = 0x9000, scoped, tag = 'internal scratch']
  %s0 = inlined_call_operand.vmem [shape: bf16[2,256,128], index: 0, kind: input, shape index: {}]
  %s1 = inlined_call_operand.vmem [shape: bf16[128,128], index: 1, kind: input, shape index: {}]
  %s2 = inlined_call_operand.vmem [shape: f32[1,128], index: 2, kind: input, shape index: {}]
  %s3 = inlined_call_operand.vmem [shape: bf16[128,128], index: 3, kind: input, shape index: {}]
  %s4 = inlined_call_operand.vmem [shape: f32[1,128], index: 4, kind: input, shape index: {}]
  %s5 = inlined_call_operand.vmem [shape: f32[2,1,128], index: 5, kind: output, shape index: {}]
  %s6 = sld [smem:[#allocation0]]
  $region53: #{my_model_forward.1} parent=0
    _
  %s8 = ssub.s32 1, %s6
  %s9 = scalar_select 0, %s8, %s6
  loop: start=0, step=1, limit=4
  $region2: #{my_model_forward.1} parent=0 // loop_pre_header
    _
  $region3: #{my_model_forward.1} parent=0 // loop_header
    %s11 = sphi 0, %s15
    %p12 = scmp.ge.s32.totalorder %s11, 4
    %s21 = sphi 0, %s23
    %s24 = sphi 0, %s21
    %s25 = sphi 0, %s24
    %s41 = sphi 0, %s25
    %s45 = sphi 0, %s45
    %s47 = sphi 0, %s45
    %s48 = sphi 0, %s47
    %s62 = sphi 0, %s48
    %s66 = sphi 0, %s66
    %s68 = sphi 0, %s66
    %s69 = sphi 0, %s68
    %s83 = sphi 0, %s69
    %s87 = sphi 0, %s87
    %s89 = sphi 0, %s87
    %s90 = sphi 0, %s89
    %s104 = sphi 0, %s90
    %s108 = sphi 0, %s108
    %s110 = sphi 0, %s108
    %s111 = sphi 0, %s110
    %s125 = sphi 0, %s111
    %s131 = sphi 0, %s133
    %s134 = sphi 0, %s131
    %s135 = sphi 0, %s134
    %s151 = sphi 0, %s135
  $region4: #{my_model_forward.1} parent=0 // loop_header_branch
    %14 = sbr.rel (%p12) target = $region8
  $region5: #{my_model_forward.1} parent=0 // loop_body
    %s16 = ssub.s32 %s11, 1
    %s17 = ssub.s32 %s11, 2
    %s18 = sadd.s32 %s11, 1
    %s19 = ssub.s32 %s11, %s18
    %p20 = scmp.eq.s32.totalorder %s19, 0
    %s22 = sadd.s32 %s21, 1
    %s23 = scalar_select %p20, %s21, %s22
    %p26 = pneg %p20
    %p27 = scmp.eq.s32.totalorder %s11, 1
    %p28 = por %p26, %p27
    %p29 = scmp.ne.s32.totalorder %s21, %s24
    %p30 = scmp.eq.s32.totalorder %s11, 0
    %p31 = por %p29, %p30
    %p32 = scmp.ne.s32.totalorder %s21, %s24
    %p33 = scmp.eq.s32.totalorder %s16, 1
    %p34 = por %p32, %p33
    %p35 = scmp.ne.s32.totalorder %s24, %s25
    %p36 = scmp.eq.s32.totalorder %s16, 0
    %p37 = por %p35, %p36
    %p38 = scmp.ne.s32.totalorder %s24, %s25
    %p39 = scmp.eq.s32.totalorder %s17, 1
    %p40 = por %p38, %p39
    %p42 = scmp.ne.s32.totalorder %s25, %s41
    %p43 = scmp.eq.s32.totalorder %s17, 0
    %p44 = por %p42, %p43
    %s46 = sadd.s32 %s45, 1
    %p49 = scmp.eq.s32.totalorder %s11, 1
    %p50 = scmp.ne.s32.totalorder %s45, %s47
    %p51 = scmp.eq.s32.totalorder %s11, 0
    %p52 = por %p50, %p51
    %p53 = scmp.ne.s32.totalorder %s45, %s47
    %p54 = scmp.eq.s32.totalorder %s16, 1
    %p55 = por %p53, %p54
    %p56 = scmp.ne.s32.totalorder %s47, %s48
    %p57 = scmp.eq.s32.totalorder %s16, 0
    %p58 = por %p56, %p57
    %p59 = scmp.ne.s32.totalorder %s47, %s48
    %p60 = scmp.eq.s32.totalorder %s17, 1
    %p61 = por %p59, %p60
    %p63 = scmp.ne.s32.totalorder %s48, %s62
    %p64 = scmp.eq.s32.totalorder %s17, 0
    %p65 = por %p63, %p64
    %s67 = sadd.s32 %s66, 1
    %p70 = scmp.eq.s32.totalorder %s11, 1
    %p71 = scmp.ne.s32.totalorder %s66, %s68
    %p72 = scmp.eq.s32.totalorder %s11, 0
    %p73 = por %p71, %p72
    %p74 = scmp.ne.s32.totalorder %s66, %s68
    %p75 = scmp.eq.s32.totalorder %s16, 1
    %p76 = por %p74, %p75
    %p77 = scmp.ne.s32.totalorder %s68, %s69
    %p78 = scmp.eq.s32.totalorder %s16, 0
    %p79 = por %p77, %p78
    %p80 = scmp.ne.s32.totalorder %s68, %s69
    %p81 = scmp.eq.s32.totalorder %s17, 1
    %p82 = por %p80, %p81
    %p84 = scmp.ne.s32.totalorder %s69, %s83
    %p85 = scmp.eq.s32.totalorder %s17, 0
    %p86 = por %p84, %p85
    %s88 = sadd.s32 %s87, 1
    %p91 = scmp.eq.s32.totalorder %s11, 1
    %p92 = scmp.ne.s32.totalorder %s87, %s89
    %p93 = scmp.eq.s32.totalorder %s11, 0
    %p94 = por %p92, %p93
    %p95 = scmp.ne.s32.totalorder %s87, %s89
    %p96 = scmp.eq.s32.totalorder %s16, 1
    %p97 = por %p95, %p96
    %p98 = scmp.ne.s32.totalorder %s89, %s90
    %p99 = scmp.eq.s32.totalorder %s16, 0
    %p100 = por %p98, %p99
    %p101 = scmp.ne.s32.totalorder %s89, %s90
    %p102 = scmp.eq.s32.totalorder %s17, 1
    %p103 = por %p101, %p102
    %p105 = scmp.ne.s32.totalorder %s90, %s104
    %p106 = scmp.eq.s32.totalorder %s17, 0
    %p107 = por %p105, %p106
    %s109 = sadd.s32 %s108, 1
    %p112 = scmp.eq.s32.totalorder %s11, 1
    %p113 = scmp.ne.s32.totalorder %s108, %s110
    %p114 = scmp.eq.s32.totalorder %s11, 0
    %p115 = por %p113, %p114
    %p116 = scmp.ne.s32.totalorder %s108, %s110
    %p117 = scmp.eq.s32.totalorder %s16, 1
    %p118 = por %p116, %p117
    %p119 = scmp.ne.s32.totalorder %s110, %s111
    %p120 = scmp.eq.s32.totalorder %s16, 0
    %p121 = por %p119, %p120
    %p122 = scmp.ne.s32.totalorder %s110, %s111
    %p123 = scmp.eq.s32.totalorder %s17, 1
    %p124 = por %p122, %p123
    %p126 = scmp.ne.s32.totalorder %s111, %s125
    %p127 = scmp.eq.s32.totalorder %s17, 0
    %p128 = por %p126, %p127
    %s129 = ssub.s32 %s11, %s18
    %p130 = scmp.eq.s32.totalorder %s129, 0
    %s132 = sadd.s32 %s131, 1
    %s133 = scalar_select %p130, %s131, %s132
    %p136 = pneg %p130
    %p137 = scmp.eq.s32.totalorder %s11, 1
    %p138 = por %p136, %p137
    %p139 = scmp.ne.s32.totalorder %s131, %s134
    %p140 = scmp.eq.s32.totalorder %s11, 0
    %p141 = por %p139, %p140
    %p142 = scmp.ne.s32.totalorder %s131, %s134
    %p143 = scmp.eq.s32.totalorder %s16, 1
    %p144 = por %p142, %p143
    %p145 = scmp.ne.s32.totalorder %s134, %s135
    %p146 = scmp.eq.s32.totalorder %s16, 0
    %p147 = por %p145, %p146
    %p148 = scmp.ne.s32.totalorder %s134, %s135
    %p149 = scmp.eq.s32.totalorder %s17, 1
    %p150 = por %p148, %p149
    %p152 = scmp.ne.s32.totalorder %s135, %s151
    %p153 = scmp.eq.s32.totalorder %s17, 0
    %p154 = por %p152, %p153
    %p155 = scmp.le.s32.totalorder 1, %s11
    %p156 = scmp.lt.s32.totalorder %s11, 3
    %p157 = pnand %p155, %p156
    %p158 = pneg %p157
    // Predicated region
    $region9: #{my_model_forward.1} parent=5 // pred_check
      _
    $region10: #{my_model_forward.1} parent=5 // pred_check_branch
      %160 = sbr.rel (%p157) target = $region12
    $region11: #{my_model_forward.1} parent=5 // pred_region
      %s161 = ssub.s32 %s11, 1
      // Predicated region
      $region13: #{my_model_forward.1} parent=11 // pred_check
        %p162 = pneg %p58
      $region14: #{my_model_forward.1} parent=11 // pred_check_branch
        %164 = sbr.rel (%p162) target = $region16
      $region15: #{my_model_forward.1} parent=11 // pred_region
        _
      $region16: #{my_model_forward.1} parent=11 // pred_fallthru
        _
      // Predicated region
      $region17: #{my_model_forward.1} parent=11 // pred_check
        %p165 = pneg %p79
      $region18: #{my_model_forward.1} parent=11 // pred_check_branch
        %167 = sbr.rel (%p165) target = $region20
      $region19: #{my_model_forward.1} parent=11 // pred_region
        _
      $region20: #{my_model_forward.1} parent=11 // pred_fallthru
        _
      // Predicated region
      $region21: #{my_model_forward.1} parent=11 // pred_check
        %p168 = pneg %p100
      $region22: #{my_model_forward.1} parent=11 // pred_check_branch
        %170 = sbr.rel (%p168) target = $region24
      $region23: #{my_model_forward.1} parent=11 // pred_region
        _
      $region24: #{my_model_forward.1} parent=11 // pred_fallthru
        _
      // Predicated region
      $region25: #{my_model_forward.1} parent=11 // pred_check
        %p171 = pneg %p121
      $region26: #{my_model_forward.1} parent=11 // pred_check_branch
        %173 = sbr.rel (%p171) target = $region28
      $region27: #{my_model_forward.1} parent=11 // pred_region
        _
      $region28: #{my_model_forward.1} parent=11 // pred_fallthru
        _
    $region12: #{my_model_forward.1} parent=5 // pred_fallthru
      _
    %p174 = scmp.lt.s32.totalorder %s11, 2
    // Predicated region
    $region29: #{my_model_forward.1} parent=5 // pred_check
      %p175 = pneg %p174
    $region30: #{my_model_forward.1} parent=5 // pred_check_branch
      %177 = sbr.rel (%p175) target = $region32
    $region31: #{my_model_forward.1} parent=5 // pred_region
      // Predicated region
      $region33: #{my_model_forward.1} parent=31 // pred_check
        %p178 = pneg %p31
      $region34: #{my_model_forward.1} parent=31 // pred_check_branch
        %180 = sbr.rel (%p178) target = $region36
      $region35: #{my_model_forward.1} parent=31 // pred_region
        %p181 = scmp.lt.s32.totalorder %s11, 1
        %s182 = scalar_select %p181, %s11, 1
        %s183 = smul.addr %s182, 32
        %s184 = smul.addr %s183, 4
        %s185 = scalar_lea.vmem %s0, %s184
      $region36: #{my_model_forward.1} parent=31 // pred_fallthru
        _
    $region32: #{my_model_forward.1} parent=5 // pred_fallthru
      _
    %p186 = scmp.le.s32.totalorder 1, %s11
    %p187 = scmp.lt.s32.totalorder %s11, 3
    %p188 = pnand %p186, %p187
    %p189 = pneg %p188
    // Predicated region
    $region37: #{my_model_forward.1} parent=5 // pred_check
      _
    $region38: #{my_model_forward.1} parent=5 // pred_check_branch
      %191 = sbr.rel (%p188) target = $region40
    $region39: #{my_model_forward.1} parent=5 // pred_region
      %s192 = ssub.s32 %s11, 1
      %p193 = scmp.lt.s32.totalorder %s16, 1
      %s194 = scalar_select %p193, %s16, 1
      %s195 = smul.addr %s194, 32
      %s196 = smul.addr %s195, 4
      %s197 = scalar_lea.vmem %s0, %s196
      %p198 = pneg %p37
      %p199 = pneg %p34
      %p200 = pneg %p58
      %p201 = pneg %p55
      %p202 = pneg %p79
      %p203 = pneg %p76
      %p204 = pneg %p100
      %p205 = pneg %p97
      %p206 = pneg %p121
      %p207 = pneg %p118
      %p208 = pneg %p147
      %p209 = pneg %p144
      %p210 = scmp.lt.s32.totalorder %s16, 1
      %s211 = scalar_select %p210, %s16, 1
      %s212 = scalar_lea.vmem %s5, %s211
      %p213 = scmp.lt.s32.totalorder %s16, 1
      %s214 = scalar_select %p213, %s16, 1
      %s215 = smul.addr %s214, 32
      %s216 = smul.addr %s215, 4
      %s217 = scalar_lea.vmem %s0, %s216
      %p218 = scmp.lt.s32.totalorder %s16, 1
      %s219 = scalar_select %p218, %s16, 1
      %s220 = scalar_lea.vmem %s5, %s219
      %v221 = vld [vmem:[%s217] sm:$0xf]
      %v222 = vld [vmem:[%s217 + $0x4] sm:$0xf]
      %v223 = vld [vmem:[%s217 + $0x8] sm:$0xf]
      %v224 = vld [vmem:[%s217 + $0xc] sm:$0xf]
      %v225 = vld [vmem:[%s217 + $0x10] sm:$0xf]
      %v226 = vld [vmem:[%s217 + $0x14] sm:$0xf]
      %v227 = vld [vmem:[%s217 + $0x18] sm:$0xf]
      %v228 = vld [vmem:[%s217 + $0x1c] sm:$0xf]
      %v229 = vld [vmem:[%s217 + $0x20] sm:$0xf]
      %v230 = vld [vmem:[%s217 + $0x24] sm:$0xf]
      %v231 = vld [vmem:[%s217 + $0x28] sm:$0xf]
      %v232 = vld [vmem:[%s217 + $0x2c] sm:$0xf]
      %v233 = vld [vmem:[%s217 + $0x30] sm:$0xf]
      %v234 = vld [vmem:[%s217 + $0x34] sm:$0xf]
      %v235 = vld [vmem:[%s217 + $0x38] sm:$0xf]
      %v236 = vld [vmem:[%s217 + $0x3c] sm:$0xf]
      %v237 = vld [vmem:[%s217 + $0x40] sm:$0xf]
      %v238 = vld [vmem:[%s217 + $0x44] sm:$0xf]
      %v239 = vld [vmem:[%s217 + $0x48] sm:$0xf]
      %v240 = vld [vmem:[%s217 + $0x4c] sm:$0xf]
      %v241 = vld [vmem:[%s217 + $0x50] sm:$0xf]
      %v242 = vld [vmem:[%s217 + $0x54] sm:$0xf]
      %v243 = vld [vmem:[%s217 + $0x58] sm:$0xf]
      %v244 = vld [vmem:[%s217 + $0x5c] sm:$0xf]
      %v245 = vld [vmem:[%s217 + $0x60] sm:$0xf]
      %v246 = vld [vmem:[%s217 + $0x64] sm:$0xf]
      %v247 = vld [vmem:[%s217 + $0x68] sm:$0xf]
      %v248 = vld [vmem:[%s217 + $0x6c] sm:$0xf]
      %v249 = vld [vmem:[%s217 + $0x70] sm:$0xf]
      %v250 = vld [vmem:[%s217 + $0x74] sm:$0xf]
      %v251 = vld [vmem:[%s217 + $0x78] sm:$0xf]
      %v252 = vld [vmem:[%s217 + $0x7c] sm:$0xf]
      %v253 = vld [vmem:[%s1] sm:$0xf]
      %v254 = vld [vmem:[%s1 + $0x4] sm:$0xf]
      %v255 = vld [vmem:[%s1 + $0x8] sm:$0xf]
      %v256 = vld [vmem:[%s1 + $0xc] sm:$0xf]
      %v257 = vld [vmem:[%s1 + $0x10] sm:$0xf]
      %v258 = vld [vmem:[%s1 + $0x14] sm:$0xf]
      %v259 = vld [vmem:[%s1 + $0x18] sm:$0xf]
      %v260 = vld [vmem:[%s1 + $0x1c] sm:$0xf]
      %v261 = vld [vmem:[%s1 + $0x20] sm:$0xf]
      %v262 = vld [vmem:[%s1 + $0x24] sm:$0xf]
      %v263 = vld [vmem:[%s1 + $0x28] sm:$0xf]
      %v264 = vld [vmem:[%s1 + $0x2c] sm:$0xf]
      %v265 = vld [vmem:[%s1 + $0x30] sm:$0xf]
      %v266 = vld [vmem:[%s1 + $0x34] sm:$0xf]
      %v267 = vld [vmem:[%s1 + $0x38] sm:$0xf]
      %v268 = vld [vmem:[%s1 + $0x3c] sm:$0xf]
      %v269 = vld [vmem:[%s2] sm:$0x1]
      %v271 = vperm.slane %v269, 0
      %v305 = vunpack.c.l.b16 %v221
      %v306 = vunpack.c.l.b16 %v222
      %v307 = vunpack.c.l.b16 %v223
      %v308 = vunpack.c.l.b16 %v224
      %v309 = vunpack.c.l.b16 %v225
      %v310 = vunpack.c.l.b16 %v226
      %v311 = vunpack.c.l.b16 %v227
      %v312 = vunpack.c.l.b16 %v228
      %v313 = vunpack.c.l.b16 %v229
      %v314 = vunpack.c.l.b16 %v230
      %v315 = vunpack.c.l.b16 %v231
      %v316 = vunpack.c.l.b16 %v232
      %v317 = vunpack.c.l.b16 %v233
      %v318 = vunpack.c.l.b16 %v234
      %v319 = vunpack.c.l.b16 %v235
      %v320 = vunpack.c.l.b16 %v236
      %v321 = vunpack.c.l.b16 %v237
      %v322 = vunpack.c.l.b16 %v238
      %v323 = vunpack.c.l.b16 %v239
      %v324 = vunpack.c.l.b16 %v240
      %v325 = vunpack.c.l.b16 %v241
      %v326 = vunpack.c.l.b16 %v242
      %v327 = vunpack.c.l.b16 %v243
      %v328 = vunpack.c.l.b16 %v244
      %v329 = vunpack.c.l.b16 %v245
      %v330 = vunpack.c.l.b16 %v246
      %v331 = vunpack.c.l.b16 %v247
      %v332 = vunpack.c.l.b16 %v248
      %v333 = vunpack.c.l.b16 %v249
      %v334 = vunpack.c.l.b16 %v250
      %v335 = vunpack.c.l.b16 %v251
      %v336 = vunpack.c.l.b16 %v252
      %v337 = vpack.c.b16 %v306, %v305
      %v338 = vpack.c.b16 %v308, %v307
      %v339 = vpack.c.b16 %v310, %v309
      %v340 = vpack.c.b16 %v312, %v311
      %v341 = vpack.c.b16 %v314, %v313
      %v342 = vpack.c.b16 %v316, %v315
      %v343 = vpack.c.b16 %v318, %v317
      %v344 = vpack.c.b16 %v320, %v319
      %v345 = vpack.c.b16 %v322, %v321
      %v346 = vpack.c.b16 %v324, %v323
      %v347 = vpack.c.b16 %v326, %v325
      %v348 = vpack.c.b16 %v328, %v327
      %v349 = vpack.c.b16 %v330, %v329
      %v350 = vpack.c.b16 %v332, %v331
      %v351 = vpack.c.b16 %v334, %v333
      %v352 = vpack.c.b16 %v336, %v335
      %v385 = vunpack.c.l.b16 %v253
      %v386 = vunpack.c.l.b16 %v254
      %v387 = vunpack.c.l.b16 %v255
      %v388 = vunpack.c.l.b16 %v256
      %v389 = vunpack.c.l.b16 %v257
      %v390 = vunpack.c.l.b16 %v258
      %v391 = vunpack.c.l.b16 %v259
      %v392 = vunpack.c.l.b16 %v260
      %v393 = vunpack.c.l.b16 %v261
      %v394 = vunpack.c.l.b16 %v262
      %v395 = vunpack.c.l.b16 %v263
      %v396 = vunpack.c.l.b16 %v264
      %v397 = vunpack.c.l.b16 %v265
      %v398 = vunpack.c.l.b16 %v266
      %v399 = vunpack.c.l.b16 %v267
      %v400 = vunpack.c.l.b16 %v268
      %v401 = vpack.c.b16 %v386, %v385
      %v402 = vpack.c.b16 %v388, %v387
      %v403 = vpack.c.b16 %v390, %v389
      %v404 = vpack.c.b16 %v392, %v391
      %v405 = vpack.c.b16 %v394, %v393
      %v406 = vpack.c.b16 %v396, %v395
      %v407 = vpack.c.b16 %v398, %v397
      %v408 = vpack.c.b16 %v400, %v399
      %417 = vmatpush.bf16.msra.mxu0 %v408
      %418 = vmatpush.bf16.msra.mxu0 %v407
      %419 = vmatpush.bf16.msra.mxu0 %v406
      %420 = vmatpush.bf16.msra.mxu0 %v405
      %421 = vmatpush.bf16.msra.mxu0 %v404
      %422 = vmatpush.bf16.msra.mxu0 %v403
      %423 = vmatpush.bf16.msra.mxu0 %v402
      %424 = vmatpush.bf16.msra.mxu0 %v401
      %425 = vmatmul.bf16.gmra.mxu0 %v337
      %v426 = vpop.f32.mrf.mxu0
      %v427 = vadd.f32 %v271, %v426
      %v428 = vpop.f32.mrf.mxu0
      %v429 = vadd.f32 %v271, %v428
      %430 = vmatmul.bf16.gmra.mxu0 %v338
      %v431 = vpop.f32.mrf.mxu0
      %v432 = vadd.f32 %v271, %v431
      %v433 = vpop.f32.mrf.mxu0
      %v434 = vadd.f32 %v271, %v433
      %435 = vmatmul.bf16.gmra.mxu0 %v339
      %v436 = vpop.f32.mrf.mxu0
      %v437 = vadd.f32 %v271, %v436
      %v438 = vpop.f32.mrf.mxu0
      %v439 = vadd.f32 %v271, %v438
      %440 = vmatmul.bf16.gmra.mxu0 %v340
      %v441 = vpop.f32.mrf.mxu0
      %v442 = vadd.f32 %v271, %v441
      %v443 = vpop.f32.mrf.mxu0
      %v444 = vadd.f32 %v271, %v443
      %445 = vmatmul.bf16.gmra.mxu0 %v341
      %v446 = vpop.f32.mrf.mxu0
      %v447 = vadd.f32 %v271, %v446
      %v448 = vpop.f32.mrf.mxu0
      %v449 = vadd.f32 %v271, %v448
      %450 = vmatmul.bf16.gmra.mxu0 %v342
      %v451 = vpop.f32.mrf.mxu0
      %v452 = vadd.f32 %v271, %v451
      %v453 = vpop.f32.mrf.mxu0
      %v454 = vadd.f32 %v271, %v453
      %455 = vmatmul.bf16.gmra.mxu0 %v343
      %v456 = vpop.f32.mrf.mxu0
      %v457 = vadd.f32 %v271, %v456
      %v458 = vpop.f32.mrf.mxu0
      %v459 = vadd.f32 %v271, %v458
      %460 = vmatmul.bf16.gmra.mxu0 %v344
      %v461 = vpop.f32.mrf.mxu0
      %v462 = vadd.f32 %v271, %v461
      %v463 = vpop.f32.mrf.mxu0
      %v464 = vadd.f32 %v271, %v463
      %465 = vmatmul.bf16.gmra.mxu0 %v345
      %v466 = vpop.f32.mrf.mxu0
      %v467 = vadd.f32 %v271, %v466
      %v468 = vpop.f32.mrf.mxu0
      %v469 = vadd.f32 %v271, %v468
      %470 = vmatmul.bf16.gmra.mxu0 %v346
      %v471 = vpop.f32.mrf.mxu0
      %v472 = vadd.f32 %v271, %v471
      %v473 = vpop.f32.mrf.mxu0
      %v474 = vadd.f32 %v271, %v473
      %475 = vmatmul.bf16.gmra.mxu0 %v347
      %v476 = vpop.f32.mrf.mxu0
      %v477 = vadd.f32 %v271, %v476
      %v478 = vpop.f32.mrf.mxu0
      %v479 = vadd.f32 %v271, %v478
      %480 = vmatmul.bf16.gmra.mxu0 %v348
      %v481 = vpop.f32.mrf.mxu0
      %v482 = vadd.f32 %v271, %v481
      %v483 = vpop.f32.mrf.mxu0
      %v484 = vadd.f32 %v271, %v483
      %485 = vmatmul.bf16.gmra.mxu0 %v349
      %v486 = vpop.f32.mrf.mxu0
      %v487 = vadd.f32 %v271, %v486
      %v488 = vpop.f32.mrf.mxu0
      %v489 = vadd.f32 %v271, %v488
      %490 = vmatmul.bf16.gmra.mxu0 %v350
      %v491 = vpop.f32.mrf.mxu0
      %v492 = vadd.f32 %v271, %v491
      %v493 = vpop.f32.mrf.mxu0
      %v494 = vadd.f32 %v271, %v493
      %495 = vmatmul.bf16.gmra.mxu0 %v351
      %v496 = vpop.f32.mrf.mxu0
      %v497 = vadd.f32 %v271, %v496
      %v498 = vpop.f32.mrf.mxu0
      %v499 = vadd.f32 %v271, %v498
      %500 = vmatmul.bf16.gmra.mxu0 %v352
      %v501 = vpop.f32.mrf.mxu0
      %v502 = vadd.f32 %v271, %v501
      %v503 = vpop.f32.mrf.mxu0
      %v504 = vadd.f32 %v271, %v503
      %505 = vdwg.mxu0
      %v506 = vmax.f32 %v427, 0.0
      %v507 = vmax.f32 %v429, 0.0
      %v508 = vmax.f32 %v432, 0.0
      %v509 = vmax.f32 %v434, 0.0
      %v510 = vmax.f32 %v437, 0.0
      %v511 = vmax.f32 %v439, 0.0
      %v512 = vmax.f32 %v442, 0.0
      %v513 = vmax.f32 %v444, 0.0
      %v514 = vmax.f32 %v447, 0.0
      %v515 = vmax.f32 %v449, 0.0
      %v516 = vmax.f32 %v452, 0.0
      %v517 = vmax.f32 %v454, 0.0
      %v518 = vmax.f32 %v457, 0.0
      %v519 = vmax.f32 %v459, 0.0
      %v520 = vmax.f32 %v462, 0.0
      %v521 = vmax.f32 %v464, 0.0
      %v522 = vmax.f32 %v467, 0.0
      %v523 = vmax.f32 %v469, 0.0
      %v524 = vmax.f32 %v472, 0.0
      %v525 = vmax.f32 %v474, 0.0
      %v526 = vmax.f32 %v477, 0.0
      %v527 = vmax.f32 %v479, 0.0
      %v528 = vmax.f32 %v482, 0.0
      %v529 = vmax.f32 %v484, 0.0
      %v530 = vmax.f32 %v487, 0.0
      %v531 = vmax.f32 %v489, 0.0
      %v532 = vmax.f32 %v492, 0.0
      %v533 = vmax.f32 %v494, 0.0
      %v534 = vmax.f32 %v497, 0.0
      %v535 = vmax.f32 %v499, 0.0
      %v536 = vmax.f32 %v502, 0.0
      %v537 = vmax.f32 %v504, 0.0
      %v538 = vadd.f32 %v506, %v507
      %v539 = vadd.f32 %v538, %v508
      %v540 = vadd.f32 %v539, %v509
      %v541 = vadd.f32 %v540, %v510
      %v542 = vadd.f32 %v541, %v511
      %v543 = vadd.f32 %v542, %v512
      %v544 = vadd.f32 %v543, %v513
      %v545 = vadd.f32 %v544, %v514
      %v546 = vadd.f32 %v545, %v515
      %v547 = vadd.f32 %v546, %v516
      %v548 = vadd.f32 %v547, %v517
      %v549 = vadd.f32 %v548, %v518
      %v550 = vadd.f32 %v549, %v519
      %v551 = vadd.f32 %v550, %v520
      %v552 = vadd.f32 %v551, %v521
      %v553 = vadd.f32 %v552, %v522
      %v554 = vadd.f32 %v553, %v523
      %v555 = vadd.f32 %v554, %v524
      %v556 = vadd.f32 %v555, %v525
      %v557 = vadd.f32 %v556, %v526
      %v558 = vadd.f32 %v557, %v527
      %v559 = vadd.f32 %v558, %v528
      %v560 = vadd.f32 %v559, %v529
      %v561 = vadd.f32 %v560, %v530
      %v562 = vadd.f32 %v561, %v531
      %v563 = vadd.f32 %v562, %v532
      %v564 = vadd.f32 %v563, %v533
      %v565 = vadd.f32 %v564, %v534
      %v566 = vadd.f32 %v565, %v535
      %v567 = vadd.f32 %v566, %v536
      %v568 = vadd.f32 %v567, %v537
      %v569 = vrot.slane %v568, 4
      %v570 = vadd.f32 %v568, %v569
      %v571 = vrot.slane %v570, 2
      %v572 = vadd.f32 %v570, %v571
      %v573 = vrot.slane %v572, 1
      %v574 = vadd.f32 %v572, %v573
      %v575 = vmul.f32 %v574, 0.00390625
      %v576 = vpack.c.bf16 %v575, %v575
      %v577 = vld [vmem:[%s3] sm:$0xf]
      %v578 = vld [vmem:[%s3 + $0x4] sm:$0xf]
      %v579 = vld [vmem:[%s3 + $0x8] sm:$0xf]
      %v580 = vld [vmem:[%s3 + $0xc] sm:$0xf]
      %v581 = vld [vmem:[%s3 + $0x10] sm:$0xf]
      %v582 = vld [vmem:[%s3 + $0x14] sm:$0xf]
      %v583 = vld [vmem:[%s3 + $0x18] sm:$0xf]
      %v584 = vld [vmem:[%s3 + $0x1c] sm:$0xf]
      %v585 = vld [vmem:[%s3 + $0x20] sm:$0xf]
      %v586 = vld [vmem:[%s3 + $0x24] sm:$0xf]
      %v587 = vld [vmem:[%s3 + $0x28] sm:$0xf]
      %v588 = vld [vmem:[%s3 + $0x2c] sm:$0xf]
      %v589 = vld [vmem:[%s3 + $0x30] sm:$0xf]
      %v590 = vld [vmem:[%s3 + $0x34] sm:$0xf]
      %v591 = vld [vmem:[%s3 + $0x38] sm:$0xf]
      %v592 = vld [vmem:[%s3 + $0x3c] sm:$0xf]
      %v593 = vld [vmem:[%s4] sm:$0x1]
      %v610 = vunpack.c.l.b16 %v577
      %v611 = vunpack.c.l.b16 %v578
      %v612 = vunpack.c.l.b16 %v579
      %v613 = vunpack.c.l.b16 %v580
      %v614 = vunpack.c.l.b16 %v581
      %v615 = vunpack.c.l.b16 %v582
      %v616 = vunpack.c.l.b16 %v583
      %v617 = vunpack.c.l.b16 %v584
      %v618 = vunpack.c.l.b16 %v585
      %v619 = vunpack.c.l.b16 %v586
      %v620 = vunpack.c.l.b16 %v587
      %v621 = vunpack.c.l.b16 %v588
      %v622 = vunpack.c.l.b16 %v589
      %v623 = vunpack.c.l.b16 %v590
      %v624 = vunpack.c.l.b16 %v591
      %v625 = vunpack.c.l.b16 %v592
      %v626 = vpack.c.b16 %v611, %v610
      %v627 = vpack.c.b16 %v613, %v612
      %v628 = vpack.c.b16 %v615, %v614
      %v629 = vpack.c.b16 %v617, %v616
      %v630 = vpack.c.b16 %v619, %v618
      %v631 = vpack.c.b16 %v621, %v620
      %v632 = vpack.c.b16 %v623, %v622
      %v633 = vpack.c.b16 %v625, %v624
      %642 = vmatpush.bf16.msra.mxu0 %v633
      %643 = vmatpush.bf16.msra.mxu0 %v632
      %644 = vmatpush.bf16.msra.mxu0 %v631
      %645 = vmatpush.bf16.msra.mxu0 %v630
      %646 = vmatpush.bf16.msra.mxu0 %v629
      %647 = vmatpush.bf16.msra.mxu0 %v628
      %648 = vmatpush.bf16.msra.mxu0 %v627
      %649 = vmatpush.bf16.msra.mxu0 %v626
      %650 = vmatmul.bf16.gmra.mxu0 %v576
      %v651 = vpop.f32.mrf.mxu0
      %v652 = vadd.f32 %v593, %v651
      %v653 = vpop.f32.mrf.mxu0
      %654 = vdwg.mxu0
      %655 = vst [vmem:[%s220] sm:$0x1] %v652
      %p656 = scmp.lt.s32.totalorder %s16, 1
      %s657 = scalar_select %p656, %s16, 1
      %s658 = scalar_lea.vmem %s5, %s657
      // Predicated region
      $region41: #{my_model_forward.1} parent=39 // pred_check
        %p659 = pneg %p144
      $region42: #{my_model_forward.1} parent=39 // pred_check_branch
        %661 = sbr.rel (%p659) target = $region44
      $region43: #{my_model_forward.1} parent=39 // pred_region
        _
      $region44: #{my_model_forward.1} parent=39 // pred_fallthru
        _
    $region40: #{my_model_forward.1} parent=5 // pred_fallthru
      _
    %p662 = scmp.le.s32.totalorder 2, %s11
    // Predicated region
    $region45: #{my_model_forward.1} parent=5 // pred_check
      %p663 = pneg %p662
    $region46: #{my_model_forward.1} parent=5 // pred_check_branch
      %665 = sbr.rel (%p663) target = $region48
    $region47: #{my_model_forward.1} parent=5 // pred_region
      %s666 = ssub.s32 %s11, 2
      // Predicated region
      $region49: #{my_model_forward.1} parent=47 // pred_check
        %p667 = pneg %p150
      $region50: #{my_model_forward.1} parent=47 // pred_check_branch
        %669 = sbr.rel (%p667) target = $region52
      $region51: #{my_model_forward.1} parent=47 // pred_region
        %p670 = scmp.lt.s32.totalorder %s17, 1
        %s671 = scalar_select %p670, %s17, 1
        %s672 = scalar_lea.vmem %s5, %s671
      $region52: #{my_model_forward.1} parent=47 // pred_fallthru
        _
    $region48: #{my_model_forward.1} parent=5 // pred_fallthru
      _
  $region6: #{my_model_forward.1} parent=0 // loop_footer
    %s15 = sadd.s32 1, %s11
  $region7: #{my_model_forward.1} parent=0 // loop_footer_branch
    %10 = sbr.rel target = $region3
  $region8: #{my_model_forward.1} parent=0 // loop_exit
    _

</llo_original>
